<compile_context>
chip_gen: v7x
topology: tpu7x:2x2x1
jax: 0.10.0
libtpu: 0.0.40
codegen_flags: <defaults>
</compile_context>

<pallas_src>
import functools

import jax
import jax.numpy as jnp
from jax.experimental import pallas as pl
from jax.experimental.pallas import tpu as pltpu

NEG_SLOPE = 0.01   # nn.LeakyReLU default negative_slope
LANE = 128
SUBLANE = 8


def _leaky_relu(x):
    return jnp.where(x > 0, x, NEG_SLOPE * x)


def _round_up(n, m):
    return ((n + m - 1) // m) * m


def heightmap_encoder_kernel(x_ref, w1_ref, b1_ref, w2_ref, b2_ref, o_ref):
    # Layer 1: Linear(C -> F1p) + LeakyReLU.  F1p is a multiple of 128 -> lane-dense.
    h = jnp.dot(x_ref[...], w1_ref[...], preferred_element_type=jnp.float32)
    h = _leaky_relu(h + b1_ref[...])
    # Layer 2: Linear(F1p -> F2p) + LeakyReLU.  F2p is a multiple of 128 -> unmasked stores.
    y = jnp.dot(h.astype(w2_ref.dtype), w2_ref[...],
                preferred_element_type=jnp.float32)
    y = _leaky_relu(y + b2_ref[...])
    o_ref[...] = y.astype(o_ref.dtype)


@functools.partial(jax.jit, static_argnames=("block_m", "compute_dtype"))
def heightmap_encoder(x, w1, b1, w2, b2, *, block_m=256, compute_dtype=jnp.float32):
    """x: (B, C).  Returns (B, F2) float32 == LeakyReLU(LeakyReLU(x@w1+b1)@w2+b2)."""
    B, C = x.shape
    F1 = w1.shape[1]
    F2 = w2.shape[1]
    F1p = _round_up(F1, LANE)
    F2p = _round_up(F2, LANE)

    # Zero-pad feature dims to full 128-lane vregs.  Padded w1 columns / b1 lanes are
    # zero -> layer-1 padded lanes are leaky_relu(0) = 0; padded w2 rows are zero so
    # they contribute nothing to layer 2; padded output lanes are sliced off below.
    w1p = jnp.zeros((C, F1p), compute_dtype).at[:, :F1].set(w1.astype(compute_dtype))
    b1p = jnp.zeros((1, F1p), jnp.float32).at[:, :F1].set(b1.reshape(1, F1))
    w2p = jnp.zeros((F1p, F2p), compute_dtype).at[:F1, :F2].set(w2.astype(compute_dtype))
    b2p = jnp.zeros((1, F2p), jnp.float32).at[:, :F2].set(b2.reshape(1, F2))

    # Batch tiling: tile must be a multiple of the f32 sublane (8); pad B so the grid
    # divides evenly.  For large B this gives real pipelining; for tiny B it is a
    # single small tile.
    tm = _round_up(min(block_m, _round_up(B, SUBLANE)), SUBLANE)
    Bp = _round_up(B, tm)
    xp = x.astype(compute_dtype)
    if Bp != B:
        xp = jnp.zeros((Bp, C), compute_dtype).at[:B].set(xp)

    flops = 2 * B * (C * F1 + F1 * F2)
    bytes_accessed = 4 * (B * C + C * F1 + F1 + F1 * F2 + F2 + B * F2)

    out = pl.pallas_call(
        heightmap_encoder_kernel,
        out_shape=jax.ShapeDtypeStruct((Bp, F2p), jnp.float32),
        grid_spec=pl.GridSpec(
            grid=(Bp // tm,),
            in_specs=[
                pl.BlockSpec((tm, C), lambda i: (i, 0)),     # x streams over batch tiles
                pl.BlockSpec((C, F1p), lambda i: (0, 0)),    # weights/biases stay resident
                pl.BlockSpec((1, F1p), lambda i: (0, 0)),
                pl.BlockSpec((F1p, F2p), lambda i: (0, 0)),
                pl.BlockSpec((1, F2p), lambda i: (0, 0)),
            ],
            out_specs=pl.BlockSpec((tm, F2p), lambda i: (i, 0)),
        ),
        compiler_params=pltpu.CompilerParams(
            # Batch tiles are independent -> shard across TensorCores on v7x megacore.
            dimension_semantics=("parallel",),
        ),
        cost_estimate=pl.CostEstimate(
            flops=flops, transcendentals=0, bytes_accessed=bytes_accessed),
    )(xp, w1p, b1p, w2p, b2p)

    return out[:B, :F2]


# TODO(synk): for tiny batches (~8 rows) this op is pure launch overhead; in production
# fuse the encoder into the Pallas kernel that consumes its output instead.


def init_linear_params(key, fan_in, fan_out):
    """Deterministic init mimicking torch.nn.Linear's U(-1/sqrt(fan_in), 1/sqrt(fan_in))."""
    kw, kb = jax.random.split(key)
    bound = 1.0 / jnp.sqrt(jnp.float32(fan_in))
    # Stored as (in, out) so the kernel can do x @ W without a transpose.
    w = jax.random.uniform(kw, (fan_in, fan_out), jnp.float32, -bound, bound)
    b = jax.random.uniform(kb, (1, fan_out), jnp.float32, -bound, bound)
    return w, b


def reference_forward(x, w1, b1, w2, b2):
    h = _leaky_relu(x @ w1 + b1)
    return _leaky_relu(h @ w2 + b2)


if __name__ == "__main__":
    # HeightmapEncoder(in_channels=32, encoder_features=[80, 60])
    in_channels = 32
    encoder_features = [80, 60]

    key = jax.random.PRNGKey(0)
    kx, k1, k2, kx2 = jax.random.split(key, 4)

    w1, b1 = init_linear_params(k1, in_channels, encoder_features[0])
    w2, b2 = init_linear_params(k2, encoder_features[0], encoder_features[1])

    # Case 1: tiny batch (single tile).
    batch = 8
    x = jax.random.normal(kx, (batch, in_channels), jnp.float32)
    out = jax.block_until_ready(heightmap_encoder(x, w1, b1, w2, b2))
    ref = reference_forward(x, w1, b1, w2, b2)
    assert out.shape == (batch, encoder_features[-1])
    assert jnp.allclose(out, ref, atol=1e-5, rtol=1e-5), "mismatch vs reference (batch=8)"

    # Case 2: multi-tile grid with batch padding (exercises pipelining path).
    batch2 = 200
    x2 = jax.random.normal(kx2, (batch2, in_channels), jnp.float32)
    out2 = jax.block_until_ready(heightmap_encoder(x2, w1, b1, w2, b2, block_m=64))
    ref2 = reference_forward(x2, w1, b1, w2, b2)
    assert out2.shape == (batch2, encoder_features[-1])
    assert jnp.allclose(out2, ref2, atol=1e-5, rtol=1e-5), "mismatch vs reference (batch=200)"

    print("KERNEL_OK")
</pallas_src>

<mosaic_0001>
module attributes {stable_mosaic.version = 11 : i64} {
  func.func @heightmap_encoder_kernel(%arg0: i32, %arg1: memref<8x32xf32, #tpu.memory_space<vmem>>, %arg2: memref<32x128xf32, #tpu.memory_space<vmem>>, %arg3: memref<1x128xf32, #tpu.memory_space<vmem>>, %arg4: memref<128x128xf32, #tpu.memory_space<vmem>>, %arg5: memref<1x128xf32, #tpu.memory_space<vmem>>, %arg6: memref<8x128xf32, #tpu.memory_space<vmem>>) attributes {dimension_semantics = [#tpu.dimension_semantics<parallel>], iteration_bounds = array<i64: 1>, scalar_prefetch = 0 : i64, scratch_operands = 0 : i64, tpu.core_type = #tpu.core_type<tc>, window_params = [{transform_indices = @transform_0, window_bounds = array<i64: 8, 32>}, {pipeline_mode = #tpu.pipeline_mode<synchronous>, transform_indices = @transform_1, window_bounds = array<i64: 32, 128>}, {pipeline_mode = #tpu.pipeline_mode<synchronous>, transform_indices = @transform_2, window_bounds = array<i64: 1, 128>}, {pipeline_mode = #tpu.pipeline_mode<synchronous>, transform_indices = @transform_3, window_bounds = array<i64: 128, 128>}, {pipeline_mode = #tpu.pipeline_mode<synchronous>, transform_indices = @transform_4, window_bounds = array<i64: 1, 128>}, {transform_indices = @transform_5, window_bounds = array<i64: 8, 128>}]} {
    %c0 = arith.constant 0 : index
    %c0_0 = arith.constant 0 : index
    %0 = vector.load %arg1[%c0, %c0_0] : memref<8x32xf32, #tpu.memory_space<vmem>>, vector<8x32xf32>
    %c0_1 = arith.constant 0 : index
    %c0_2 = arith.constant 0 : index
    %1 = vector.load %arg2[%c0_1, %c0_2] : memref<32x128xf32, #tpu.memory_space<vmem>>, vector<32x128xf32>
    %cst = arith.constant dense<0.000000e+00> : vector<8x128xf32>
    %2 = tpu.matmul %0, %1, %cst {dimension_numbers = #tpu.dot_dimension_numbers<[1], [0], [0], [1], [0, 0, 1, 1], [], []>} : vector<8x32xf32>, vector<32x128xf32>, vector<8x128xf32> -> vector<8x128xf32>
    %c0_3 = arith.constant 0 : index
    %c0_4 = arith.constant 0 : index
    %3 = vector.load %arg3[%c0_3, %c0_4] : memref<1x128xf32, #tpu.memory_space<vmem>>, vector<1x128xf32>
    %4 = vector.broadcast %3 : vector<1x128xf32> to vector<8x128xf32>
    %5 = arith.addf %2, %4 : vector<8x128xf32>
    %cst_5 = arith.constant 0.000000e+00 : f32
    %6 = vector.broadcast %cst_5 : f32 to vector<8x128xf32>
    %7 = arith.cmpf ogt, %5, %6 : vector<8x128xf32>
    %cst_6 = arith.constant 0.00999999977 : f32
    %8 = vector.broadcast %cst_6 : f32 to vector<8x128xf32>
    %9 = arith.mulf %8, %5 : vector<8x128xf32>
    %10 = arith.select %7, %5, %9 : vector<8x128xi1>, vector<8x128xf32>
    %c0_7 = arith.constant 0 : index
    %c0_8 = arith.constant 0 : index
    %11 = vector.load %arg4[%c0_7, %c0_8] : memref<128x128xf32, #tpu.memory_space<vmem>>, vector<128x128xf32>
    %cst_9 = arith.constant dense<0.000000e+00> : vector<8x128xf32>
    %12 = tpu.matmul %10, %11, %cst_9 {dimension_numbers = #tpu.dot_dimension_numbers<[1], [0], [0], [1], [0, 0, 1, 1], [], []>} : vector<8x128xf32>, vector<128x128xf32>, vector<8x128xf32> -> vector<8x128xf32>
    %c0_10 = arith.constant 0 : index
    %c0_11 = arith.constant 0 : index
    %13 = vector.load %arg5[%c0_10, %c0_11] : memref<1x128xf32, #tpu.memory_space<vmem>>, vector<1x128xf32>
    %14 = vector.broadcast %13 : vector<1x128xf32> to vector<8x128xf32>
    %15 = arith.addf %12, %14 : vector<8x128xf32>
    %cst_12 = arith.constant 0.000000e+00 : f32
    %16 = vector.broadcast %cst_12 : f32 to vector<8x128xf32>
    %17 = arith.cmpf ogt, %15, %16 : vector<8x128xf32>
    %cst_13 = arith.constant 0.00999999977 : f32
    %18 = vector.broadcast %cst_13 : f32 to vector<8x128xf32>
    %19 = arith.mulf %18, %15 : vector<8x128xf32>
    %20 = arith.select %17, %15, %19 : vector<8x128xi1>, vector<8x128xf32>
    %c0_14 = arith.constant 0 : index
    %c0_15 = arith.constant 0 : index
    %21 = vector.load %arg6[%c0_14, %c0_15] : memref<8x128xf32, #tpu.memory_space<vmem>>, vector<8x128xf32>
    tpu.vector_store %arg6[%c0_14, %c0_15], %20 {strides = array<i32>} : memref<8x128xf32, #tpu.memory_space<vmem>>, vector<8x128xf32>,
    return
  }
  func.func @transform_0(%arg0: i32) -> (i32, i32) {
    %c0_i32 = arith.constant 0 : i32
    %c0_i32_0 = arith.constant 0 : i32
    return %arg0, %c0_i32 : i32, i32
  }
  func.func @transform_1(%arg0: i32) -> (i32, i32) {
    %c0_i32 = arith.constant 0 : i32
    %c0_i32_0 = arith.constant 0 : i32
    %c0_i32_1 = arith.constant 0 : i32
    return %c0_i32, %c0_i32_0 : i32, i32
  }
  func.func @transform_2(%arg0: i32) -> (i32, i32) {
    %c0_i32 = arith.constant 0 : i32
    %c0_i32_0 = arith.constant 0 : i32
    %c0_i32_1 = arith.constant 0 : i32
    return %c0_i32, %c0_i32_0 : i32, i32
  }
  func.func @transform_3(%arg0: i32) -> (i32, i32) {
    %c0_i32 = arith.constant 0 : i32
    %c0_i32_0 = arith.constant 0 : i32
    %c0_i32_1 = arith.constant 0 : i32
    return %c0_i32, %c0_i32_0 : i32, i32
  }
  func.func @transform_4(%arg0: i32) -> (i32, i32) {
    %c0_i32 = arith.constant 0 : i32
    %c0_i32_0 = arith.constant 0 : i32
    %c0_i32_1 = arith.constant 0 : i32
    return %c0_i32, %c0_i32_0 : i32, i32
  }
  func.func @transform_5(%arg0: i32) -> (i32, i32) {
    %c0_i32 = arith.constant 0 : i32
    %c0_i32_0 = arith.constant 0 : i32
    return %arg0, %c0_i32 : i32, i32
  }
}

</mosaic_0001>

<llo_original>
// kernel: heightmap_encoder.1
$region0: #{heightmap_encoder.1}
  #allocation0 [shape = 'u32[]', space=smem, size = 0x4, offset = 0x4, fixed_abs, tag = 'smem constant byte address 0x4 - core index']
  #allocation1 [shape = 'u32[144,128]{1,0:T(1,128)}', space=vmem, size = 0x12000, scoped, tag = 'internal scratch']
  %s0 = inlined_call_operand.vmem [shape: f32[8,32], index: 0, kind: input, shape index: {}]
  %s1 = inlined_call_operand.vmem [shape: f32[32,128], index: 1, kind: input, shape index: {}]
  %s2 = inlined_call_operand.vmem [shape: f32[1,128], index: 2, kind: input, shape index: {}]
  %s3 = inlined_call_operand.vmem [shape: f32[128,128], index: 3, kind: input, shape index: {}]
  %s4 = inlined_call_operand.vmem [shape: f32[1,128], index: 4, kind: input, shape index: {}]
  %s5 = inlined_call_operand.hbm [shape: f32[8,128], index: 5, kind: output, shape index: {}]
  %s6 = sld [smem:[#allocation0]]
  $region30: #{heightmap_encoder.1} parent=0
    _
  %s8 = ssub.s32 1, %s6
  %s9 = scalar_select 0, %s8, %s6
  $region1: #{heightmap_encoder.1} parent=0
    #allocation2 [shape = 'u8[4096]{0}', space=vmem, size = 0x1000, scoped, tag = 'output window, operand 0, single buffered']
    #allocation3 [shape = 's32[1]{0}', space=sflag, size = 0x4, scoped, tag = 'scoped memory for heightmap_encoder.1']
    %10 = vsyncpa [#allocation3], 0
    // Predicated region
    $region2: #{heightmap_encoder.1} parent=1 // pred_check
      _
    $region3: #{heightmap_encoder.1} parent=1 // pred_check_branch
      %12 = sbr.rel (0) target = $region5
    $region4: #{heightmap_encoder.1} parent=1 // pred_region
      _
    $region5: #{heightmap_encoder.1} parent=1 // pred_fallthru
      _
    // Predicated region
    $region6: #{heightmap_encoder.1} parent=1 // pred_check
      _
    $region7: #{heightmap_encoder.1} parent=1 // pred_check_branch
      %14 = sbr.rel (0) target = $region9
    $region8: #{heightmap_encoder.1} parent=1 // pred_region
      _
    $region9: #{heightmap_encoder.1} parent=1 // pred_fallthru
      _
    // Predicated region
    $region10: #{heightmap_encoder.1} parent=1 // pred_check
      _
    $region11: #{heightmap_encoder.1} parent=1 // pred_check_branch
      %16 = sbr.rel (0) target = $region13
    $region12: #{heightmap_encoder.1} parent=1 // pred_region
      _
    $region13: #{heightmap_encoder.1} parent=1 // pred_fallthru
      _
    // Predicated region
    $region14: #{heightmap_encoder.1} parent=1 // pred_check
      _
    $region15: #{heightmap_encoder.1} parent=1 // pred_check_branch
      %18 = sbr.rel (0) target = $region17
    $region16: #{heightmap_encoder.1} parent=1 // pred_region
      _
    $region17: #{heightmap_encoder.1} parent=1 // pred_fallthru
      _
    // Predicated region
    $region18: #{heightmap_encoder.1} parent=1 // pred_check
      _
    $region19: #{heightmap_encoder.1} parent=1 // pred_check_branch
      %20 = sbr.rel (0) target = $region21
    $region20: #{heightmap_encoder.1} parent=1 // pred_region
      _
    $region21: #{heightmap_encoder.1} parent=1 // pred_fallthru
      _
    %v21 = vld [vmem:[%s0] sm:$0xff]
    %v22 = vld [vmem:[%s1] sm:$0xff]
    %v23 = vld [vmem:[%s1 + $0x8] sm:$0xff]
    %v24 = vld [vmem:[%s1 + $0x10] sm:$0xff]
    %v25 = vld [vmem:[%s1 + $0x18] sm:$0xff]
    %v26 = vld [vmem:[%s2] sm:$0x1]
    %v28 = vlaneseq
    %v29 = vshrl.u32 %v28, 7
    %v30 = vsub.s32 0, %v29
    %v31 = vrot.slane %v26, %v30
    %vm33 = vcmask 261120
    %v35 = vsel %vm33, %v21, 0
    %37 = vmatprep.subr.mxu0 0.0
    %38 = vmatpush1.msra.mxu0 %v22
    %39 = vmatprep.subr.mxu0 0.0
    %40 = vmatpush1.msra.mxu0 %v23
    %41 = vmatprep.subr.mxu0 0.0
    %42 = vmatpush1.msra.mxu0 %v24
    %43 = vmatprep.subr.mxu0 0.0
    %44 = vmatpush1.msra.mxu0 %v25
    %45 = vmatprep.subr.mxu0 0.0
    %46 = vmatpush1.msra.mxu0 0.0
    %47 = vmatprep.subr.mxu0 0.0
    %48 = vmatpush1.msra.mxu0 0.0
    %49 = vmatprep.subr.mxu0 0.0
    %50 = vmatpush1.msra.mxu0 0.0
    %51 = vmatprep.subr.mxu0 0.0
    %52 = vmatpush1.msra.mxu0 0.0
    %53 = vmatprep.subr.mxu0 0.0
    %54 = vmatpush1.msra.mxu0 0.0
    %55 = vmatprep.subr.mxu0 0.0
    %56 = vmatpush1.msra.mxu0 0.0
    %57 = vmatprep.subr.mxu0 0.0
    %58 = vmatpush1.msra.mxu0 0.0
    %59 = vmatprep.subr.mxu0 0.0
    %60 = vmatpush1.msra.mxu0 0.0
    %61 = vmatprep.subr.mxu0 0.0
    %62 = vmatpush1.msra.mxu0 0.0
    %63 = vmatprep.subr.mxu0 0.0
    %64 = vmatpush1.msra.mxu0 0.0
    %65 = vmatprep.subr.mxu0 0.0
    %66 = vmatpush1.msra.mxu0 0.0
    %67 = vmatprep.subr.mxu0 0.0
    %68 = vmatpush1.msra.mxu0 0.0
    %69 = vmatprep.subr.mxu0 0.0
    %70 = vmatpush1.msra.mxu0 0.0
    %71 = vmatprep.subr.mxu0 0.0
    %72 = vmatpush1.msra.mxu0 0.0
    %73 = vmatprep.subr.mxu0 0.0
    %74 = vmatpush1.msra.mxu0 0.0
    %75 = vmatprep.subr.mxu0 0.0
    %76 = vmatpush1.msra.mxu0 0.0
    %77 = vmatprep.subr.mxu0 0.0
    %78 = vmatpush1.msra.mxu0 0.0
    %79 = vmatprep.subr.mxu0 0.0
    %80 = vmatpush1.msra.mxu0 0.0
    %81 = vmatprep.subr.mxu0 0.0
    %82 = vmatpush1.msra.mxu0 0.0
    %83 = vmatprep.subr.mxu0 0.0
    %84 = vmatpush1.msra.mxu0 0.0
    %85 = vmatprep.subr.mxu0 0.0
    %86 = vmatpush1.msra.mxu0 0.0
    %87 = vmatprep.subr.mxu0 0.0
    %88 = vmatpush1.msra.mxu0 0.0
    %89 = vmatprep.subr.mxu0 0.0
    %90 = vmatpush1.msra.mxu0 0.0
    %91 = vmatprep.subr.mxu0 0.0
    %92 = vmatpush1.msra.mxu0 0.0
    %93 = vmatprep.subr.mxu0 0.0
    %94 = vmatpush1.msra.mxu0 0.0
    %95 = vmatprep.subr.mxu0 0.0
    %96 = vmatpush1.msra.mxu0 0.0
    %97 = vmatprep.subr.mxu0 0.0
    %98 = vmatpush1.msra.mxu0 0.0
    %99 = vmatprep.subr.mxu0 0.0
    %100 = vmatpush1.msra.mxu0 0.0
    %101 = vmatprep.mubr.f32.mxu0 0.0
    %102 = vmatmul.mubr.f32.gmra.mrb[0].mxu0 %v35
    %v103 = vpop.f32.mrb[0].mxu0
    %v104 = vadd.f32 %v31, %v103
    %v105 = vpop.f32.mrb[0].mxu0
    %106 = vdwg.mxu0
    %vm107 = vcmp.gt.f32.partialorder %v104, 0.0
    %v108 = vmul.f32 %v104, 0.01
    %v109 = vsel %vm107, %v104, %v108
    %v110 = vld [vmem:[%s3] sm:$0xff]
    %v111 = vld [vmem:[%s3 + $0x8] sm:$0xff]
    %v112 = vld [vmem:[%s3 + $0x10] sm:$0xff]
    %v113 = vld [vmem:[%s3 + $0x18] sm:$0xff]
    %v114 = vld [vmem:[%s3 + $0x20] sm:$0xff]
    %v115 = vld [vmem:[%s3 + $0x28] sm:$0xff]
    %v116 = vld [vmem:[%s3 + $0x30] sm:$0xff]
    %v117 = vld [vmem:[%s3 + $0x38] sm:$0xff]
    %v118 = vld [vmem:[%s3 + $0x40] sm:$0xff]
    %v119 = vld [vmem:[%s3 + $0x48] sm:$0xff]
    %v120 = vld [vmem:[%s3 + $0x50] sm:$0xff]
    %v121 = vld [vmem:[%s3 + $0x58] sm:$0xff]
    %v122 = vld [vmem:[%s3 + $0x60] sm:$0xff]
    %v123 = vld [vmem:[%s3 + $0x68] sm:$0xff]
    %v124 = vld [vmem:[%s3 + $0x70] sm:$0xff]
    %v125 = vld [vmem:[%s3 + $0x78] sm:$0xff]
    %v126 = vld [vmem:[%s4] sm:$0x1]
    %v128 = vlaneseq
    %v129 = vshrl.u32 %v128, 7
    %v130 = vsub.s32 0, %v129
    %v131 = vrot.slane %v126, %v130
    %133 = vmatprep.subr.mxu0 0.0
    %134 = vmatpush1.msra.mxu0 %v110
    %135 = vmatprep.subr.mxu0 0.0
    %136 = vmatpush1.msra.mxu0 %v111
    %137 = vmatprep.subr.mxu0 0.0
    %138 = vmatpush1.msra.mxu0 %v112
    %139 = vmatprep.subr.mxu0 0.0
    %140 = vmatpush1.msra.mxu0 %v113
    %141 = vmatprep.subr.mxu0 0.0
    %142 = vmatpush1.msra.mxu0 %v114
    %143 = vmatprep.subr.mxu0 0.0
    %144 = vmatpush1.msra.mxu0 %v115
    %145 = vmatprep.subr.mxu0 0.0
    %146 = vmatpush1.msra.mxu0 %v116
    %147 = vmatprep.subr.mxu0 0.0
    %148 = vmatpush1.msra.mxu0 %v117
    %149 = vmatprep.subr.mxu0 0.0
    %150 = vmatpush1.msra.mxu0 %v118
    %151 = vmatprep.subr.mxu0 0.0
    %152 = vmatpush1.msra.mxu0 %v119
    %153 = vmatprep.subr.mxu0 0.0
    %154 = vmatpush1.msra.mxu0 %v120
    %155 = vmatprep.subr.mxu0 0.0
    %156 = vmatpush1.msra.mxu0 %v121
    %157 = vmatprep.subr.mxu0 0.0
    %158 = vmatpush1.msra.mxu0 %v122
    %159 = vmatprep.subr.mxu0 0.0
    %160 = vmatpush1.msra.mxu0 %v123
    %161 = vmatprep.subr.mxu0 0.0
    %162 = vmatpush1.msra.mxu0 %v124
    %163 = vmatprep.subr.mxu0 0.0
    %164 = vmatpush1.msra.mxu0 %v125
    %165 = vmatprep.subr.mxu0 0.0
    %166 = vmatpush1.msra.mxu0 0.0
    %167 = vmatprep.subr.mxu0 0.0
    %168 = vmatpush1.msra.mxu0 0.0
    %169 = vmatprep.subr.mxu0 0.0
    %170 = vmatpush1.msra.mxu0 0.0
    %171 = vmatprep.subr.mxu0 0.0
    %172 = vmatpush1.msra.mxu0 0.0
    %173 = vmatprep.subr.mxu0 0.0
    %174 = vmatpush1.msra.mxu0 0.0
    %175 = vmatprep.subr.mxu0 0.0
    %176 = vmatpush1.msra.mxu0 0.0
    %177 = vmatprep.subr.mxu0 0.0
    %178 = vmatpush1.msra.mxu0 0.0
    %179 = vmatprep.subr.mxu0 0.0
    %180 = vmatpush1.msra.mxu0 0.0
    %181 = vmatprep.subr.mxu0 0.0
    %182 = vmatpush1.msra.mxu0 0.0
    %183 = vmatprep.subr.mxu0 0.0
    %184 = vmatpush1.msra.mxu0 0.0
    %185 = vmatprep.subr.mxu0 0.0
    %186 = vmatpush1.msra.mxu0 0.0
    %187 = vmatprep.subr.mxu0 0.0
    %188 = vmatpush1.msra.mxu0 0.0
    %189 = vmatprep.subr.mxu0 0.0
    %190 = vmatpush1.msra.mxu0 0.0
    %191 = vmatprep.subr.mxu0 0.0
    %192 = vmatpush1.msra.mxu0 0.0
    %193 = vmatprep.subr.mxu0 0.0
    %194 = vmatpush1.msra.mxu0 0.0
    %195 = vmatprep.subr.mxu0 0.0
    %196 = vmatpush1.msra.mxu0 0.0
    %197 = vmatprep.mubr.f32.mxu0 0.0
    %198 = vmatmul.mubr.f32.gmra.mrb[0].mxu0 %v109
    %v199 = vpop.f32.mrb[0].mxu0
    %v200 = vadd.f32 %v131, %v199
    %v201 = vpop.f32.mrb[0].mxu0
    %202 = vdwg.mxu0
    %vm203 = vcmp.gt.f32.partialorder %v200, 0.0
    %v204 = vmul.f32 %v200, 0.01
    %v205 = vsel %vm203, %v200, %v204
    %206 = vst [vmem:[#allocation2] sm:$0xff] %v205
    // Predicated region
    $region22: #{heightmap_encoder.1} parent=1 // pred_check
      _
    $region23: #{heightmap_encoder.1} parent=1 // pred_check_branch
      %208 = sbr.rel (0) target = $region25
    $region24: #{heightmap_encoder.1} parent=1 // pred_region
      %s210 = ssub.s32 128, 128
      %211 = vsyncadd [#allocation3], %s210
      %s213 = sshll.u32 [#allocation2], 4
      %s214 = int_to_ptr.vmem [resolvable:$true] %s213
      %216 = dma.vmem_to_hbm [thread:$0]  %s214, 128, %s5, [#allocation3]
    $region25: #{heightmap_encoder.1} parent=1 // pred_fallthru
      _
    // Predicated region
    $region26: #{heightmap_encoder.1} parent=1 // pred_check
      _
    $region27: #{heightmap_encoder.1} parent=1 // pred_check_branch
      %218 = sbr.rel (0) target = $region29
    $region28: #{heightmap_encoder.1} parent=1 // pred_region
      %219 = dma.done [#allocation3], 128
    $region29: #{heightmap_encoder.1} parent=1 // pred_fallthru
      _
    %220 = vsyncpa [#allocation3], 1

</llo_original>
